<compile_context>
chip_gen: v6e
topology: v6e:2x2x1
jax: 0.10.0
libtpu: 0.0.40
codegen_flags: <defaults>
</compile_context>

<pallas_src>
import numpy as np
import jax
import jax.numpy as jnp
from jax.experimental import pallas as pl
from jax.experimental.pallas import tpu as pltpu

OBS_DIM = 32          # obs_shape = (32,)  -> MLPBase
HIDDEN = 64           # MLPBase default hidden_size
NUM_ACTIONS = 6       # Discrete(6) action space
FIXED_BETA = 1.0      # est_value=False -> beta_value = ones_like(masks) * fixed_beta
FUSED = 2 * HIDDEN    # 128 lanes: [0:64) actor branch | [64:128) critic branch
SLAB = 128            # lane-dense output slab width

# Default batch tile: 4096 rows.  Per step, double-buffered x+out is
# ~4096*(32+128)*4*2 B ≈ 5.2 MiB + ~0.1 MiB weights -> fits even v5e's 16 MiB
# scoped-VMEM default; raise vmem_limit_bytes before going much larger.
DEFAULT_BATCH_TILE = 4096

# slab lane layout:
#   [0 : HIDDEN)   actor_features
#   HIDDEN         value (straight from the fused-head matmul)
#   HIDDEN + 1     action_log_prob of the mode
#   HIDDEN + 2     per-row entropy
#   HIDDEN + 3     action index (stored as f32; exact for small ints)


def policy_act_kernel(x_ref, w1_ref, w2_ref, wh_ref, b_ref, out_ref):
    # bf16 activations feeding the MXU (native single-pass); f32 accumulation.
    x = x_ref[...].astype(jnp.bfloat16)
    b1 = b_ref[0:1, :]
    b2 = b_ref[1:2, :]
    bh = b_ref[2:3, :]

    # fused layer 1: [actor | critic] hidden, one full-128-lane MXU pass
    h1 = jnp.tanh(jnp.dot(x, w1_ref[...],
                          preferred_element_type=jnp.float32) + b1)
    # fused layer 2: block-diagonal [[aw2, 0], [0, cw2]]
    h2 = jnp.tanh(jnp.dot(h1.astype(jnp.bfloat16), w2_ref[...],
                          preferred_element_type=jnp.float32) + b2)
    # fused head: lanes [0:A) dist logits (actor half), lane HIDDEN = critic value,
    # every other lane exactly 0 (zero-padded weights / bias)
    head = jnp.dot(h2.astype(jnp.bfloat16), wh_ref[...],
                   preferred_element_type=jnp.float32) + bh

    lane = jax.lax.broadcasted_iota(jnp.int32, head.shape, 1)      # (B, 128)
    is_logit = lane < NUM_ACTIONS
    logits = jnp.where(is_logit, head, jnp.float32(-1e30))

    # ---- FixedCategorical mode / log_prob(mode) / entropy via log-sum-exp only:
    #   z = logits - max; at the argmax lane z == 0, so log_prob(mode) = -log(denom)
    #   entropy = log(denom) - sum(ez * z) / denom   (ez is already 0 on pad lanes)
    row_max = jnp.max(logits, axis=-1, keepdims=True)
    z = logits - row_max
    ez = jnp.where(is_logit, jnp.exp(z), 0.0)
    denom = jnp.sum(ez, axis=-1, keepdims=True)
    log_denom = jnp.log(denom)
    inv_denom = pl.reciprocal(denom, approx=True)
    alogp = -log_denom                                              # (B, 1)
    ent_rows = log_denom - jnp.sum(ez * z, axis=-1, keepdims=True) * inv_denom
    action = jnp.min(jnp.where(logits == row_max, lane, SLAB),
                     axis=-1, keepdims=True)                        # first argmax

    # ---- pack everything into one lane-dense slab -> single unmasked store
    slab = jnp.where(lane < HIDDEN, h2, head)    # actor features | value | zeros
    slab = jnp.where(lane == HIDDEN + 1, alogp, slab)
    slab = jnp.where(lane == HIDDEN + 2, ent_rows, slab)
    slab = jnp.where(lane == HIDDEN + 3, action.astype(jnp.float32), slab)
    out_ref[...] = slab.astype(out_ref.dtype)


def _gridded_call(x_pad, w_ins, batch_tile, out_dtype, buffered):
    n_tiles = x_pad.shape[0] // batch_tile
    if buffered:
        # Grid-invariant weights: single-buffer (no useless double-buffer VMEM).
        w_specs = [pl.BlockSpec(w.shape, lambda i: (0, 0),
                                pipeline_mode=pl.Buffered(1)) for w in w_ins]
    else:
        w_specs = [pl.BlockSpec(w.shape, lambda i: (0, 0)) for w in w_ins]
    return pl.pallas_call(
        policy_act_kernel,
        grid=(n_tiles,),
        in_specs=[pl.BlockSpec((batch_tile, OBS_DIM), lambda i: (i, 0))] + w_specs,
        out_specs=pl.BlockSpec((batch_tile, SLAB), lambda i: (i, 0)),
        out_shape=jax.ShapeDtypeStruct((x_pad.shape[0], SLAB), out_dtype),
        compiler_params=pltpu.CompilerParams(
            dimension_semantics=("parallel",)),
    )(x_pad, *w_ins)


def policy_act(x, rnn_hxs, masks, prev_value, packed, *,
               batch_tile=DEFAULT_BATCH_TILE, slab_dtype=jnp.float32):
    """slab_dtype=jnp.bfloat16 halves writeback traffic (best payoff on v5e)."""
    B = x.shape[0]
    w_ins = (packed['W1'], packed['W2'], packed['Wh'], packed['B'])

    if batch_tile is not None and B > batch_tile:
        # Large batch: pad rows to a tile multiple and shard over a parallel grid.
        pad = (-B) % batch_tile
        x_pad = jnp.pad(x, ((0, pad), (0, 0))) if pad else x
        try:
            slab = _gridded_call(x_pad, w_ins, batch_tile, slab_dtype, buffered=True)
        except Exception:
            # pl.Buffered(1) not supported on this version -> default pipelining.
            slab = _gridded_call(x_pad, w_ins, batch_tile, slab_dtype, buffered=False)
        slab = slab[:B]
    else:
        # Small batch: single invocation, whole problem resident in VMEM.
        slab = pl.pallas_call(
            policy_act_kernel,
            out_shape=jax.ShapeDtypeStruct((B, SLAB), slab_dtype),
        )(x, *w_ins)

    slab = slab.astype(jnp.float32)
    actor_feat = slab[:, :HIDDEN]
    value = slab[:, HIDDEN:HIDDEN + 1]
    alogp = slab[:, HIDDEN + 1:HIDDEN + 2]
    ent = jnp.mean(slab[:, HIDDEN + 2])                 # cross-block-safe mean
    action = slab[:, HIDDEN + 3:HIDDEN + 4].astype(jnp.int32)

    # beta / value mixing from Policy.act, kept in the wrapper: with
    # fixed_beta == 1 vmix == value; kept general for fixed_beta != 1 without
    # round-tripping masks/prev_value through VMEM.
    beta_v = jnp.ones_like(masks) * FIXED_BETA
    prev_v = masks * prev_value + (1.0 - masks) * value
    vmix = beta_v * value + (1.0 - beta_v) * prev_v

    # rnn_hxs passes through unchanged for a non-recurrent base.
    return value, action, alogp, rnn_hxs, vmix, beta_v, ent, actor_feat


def init_params(key):
    ortho = jax.nn.initializers.orthogonal
    gain_h = float(np.sqrt(2.0))
    ks = jax.random.split(key, 6)
    p = {}
    # actor: Linear(OBS,H)+Tanh, Linear(H,H)+Tanh  (orthogonal gain sqrt(2), bias 0)
    p['aw1'] = ortho(gain_h)(ks[0], (OBS_DIM, HIDDEN), jnp.float32)
    p['ab1'] = jnp.zeros((1, HIDDEN), jnp.float32)
    p['aw2'] = ortho(gain_h)(ks[1], (HIDDEN, HIDDEN), jnp.float32)
    p['ab2'] = jnp.zeros((1, HIDDEN), jnp.float32)
    # critic: same architecture
    p['cw1'] = ortho(gain_h)(ks[2], (OBS_DIM, HIDDEN), jnp.float32)
    p['cb1'] = jnp.zeros((1, HIDDEN), jnp.float32)
    p['cw2'] = ortho(gain_h)(ks[3], (HIDDEN, HIDDEN), jnp.float32)
    p['cb2'] = jnp.zeros((1, HIDDEN), jnp.float32)
    # critic_linear: Linear(H, 1)  (orthogonal gain 1, bias 0)
    p['clw'] = ortho(1.0)(ks[4], (HIDDEN, 1), jnp.float32)
    p['clb'] = jnp.zeros((1, 1), jnp.float32)
    # Categorical dist head: Linear(H, A)  (orthogonal gain 0.01, bias 0)
    p['dw'] = ortho(0.01)(ks[5], (HIDDEN, NUM_ACTIONS), jnp.float32)
    p['db'] = jnp.zeros((1, NUM_ACTIONS), jnp.float32)
    return p


def pack_params(p):
    """Host-side packing: 3 lane-dense bf16 weights + one (8,128) f32 bias block."""
    W1 = jnp.concatenate([p['aw1'], p['cw1']], axis=1)               # (32, 128)
    W2 = jnp.zeros((FUSED, FUSED), jnp.float32)
    W2 = W2.at[:HIDDEN, :HIDDEN].set(p['aw2'])
    W2 = W2.at[HIDDEN:, HIDDEN:].set(p['cw2'])                       # block-diag (128,128)
    Wh = jnp.zeros((FUSED, SLAB), jnp.float32)
    Wh = Wh.at[:HIDDEN, :NUM_ACTIONS].set(p['dw'])                   # logits <- actor half
    Wh = Wh.at[HIDDEN:, HIDDEN:HIDDEN + 1].set(p['clw'])             # value -> lane HIDDEN
    Ball = jnp.zeros((8, SLAB), jnp.float32)                         # rows 0/1/2 = b1/b2/bh
    Ball = Ball.at[0, :HIDDEN].set(p['ab1'][0]).at[0, HIDDEN:].set(p['cb1'][0])
    Ball = Ball.at[1, :HIDDEN].set(p['ab2'][0]).at[1, HIDDEN:].set(p['cb2'][0])
    Ball = Ball.at[2, :NUM_ACTIONS].set(p['db'][0])
    Ball = Ball.at[2, HIDDEN].set(p['clb'][0, 0])
    return dict(W1=W1.astype(jnp.bfloat16), W2=W2.astype(jnp.bfloat16),
                Wh=Wh.astype(jnp.bfloat16), B=Ball)


def reference_act(x, masks, prev_value, p):
    """Pure-JAX reference using the same bf16 weight/activation quantization."""
    q = lambda a: a.astype(jnp.bfloat16).astype(jnp.float32)
    dot = lambda a, b: jnp.dot(a, b, precision=jax.lax.Precision.HIGHEST)
    xq = q(x)
    hc = jnp.tanh(dot(xq, q(p['cw1'])) + p['cb1'])
    hc = jnp.tanh(dot(q(hc), q(p['cw2'])) + p['cb2'])
    value = dot(q(hc), q(p['clw'])) + p['clb']
    ha = jnp.tanh(dot(xq, q(p['aw1'])) + p['ab1'])
    ha = jnp.tanh(dot(q(ha), q(p['aw2'])) + p['ab2'])
    logits = dot(q(ha), q(p['dw'])) + p['db']
    beta = jnp.ones_like(masks) * FIXED_BETA
    prev_v = masks * prev_value + (1.0 - masks) * value
    vmix = beta * value + (1.0 - beta) * prev_v
    logp = jax.nn.log_softmax(logits, axis=-1)
    action = jnp.argmax(logits, axis=-1, keepdims=True)
    alogp = jnp.take_along_axis(logp, action, axis=-1)
    ent = jnp.mean(-jnp.sum(jnp.exp(logp) * logp, axis=-1))
    return value, action.astype(jnp.int32), alogp, vmix, beta, ent, ha, logits


if __name__ == "__main__":
    key = jax.random.PRNGKey(0)
    kp, kx, kpv, km, kx2, kpv2, km2 = jax.random.split(key, 7)
    raw = init_params(kp)
    packed = pack_params(raw)

    # ---- small-batch (gridless) path vs pure-JAX reference ----
    B = 8
    x = jax.random.normal(kx, (B, OBS_DIM), jnp.float32)
    rnn_hxs = jnp.zeros((B, 1), jnp.float32)     # recurrent_hidden_state_size == 1
    masks = (jax.random.uniform(km, (B, 1)) > 0.25).astype(jnp.float32)
    prev_value = jax.random.normal(kpv, (B, 1), jnp.float32)

    out = jax.block_until_ready(policy_act(x, rnn_hxs, masks, prev_value, packed))
    value, action, alogp, rnn_out, vmix, beta_v, ent, actor_feat = out

    rv, ra, ral, rvm, rb, rent, rha, rlogits = reference_act(x, masks, prev_value, raw)
    np.testing.assert_allclose(np.asarray(value), np.asarray(rv), rtol=1e-2, atol=1e-2)
    np.testing.assert_allclose(np.asarray(vmix), np.asarray(rvm), rtol=1e-2, atol=1e-2)
    np.testing.assert_allclose(np.asarray(actor_feat), np.asarray(rha), rtol=1e-2, atol=1e-2)
    np.testing.assert_allclose(np.asarray(beta_v), np.asarray(rb), rtol=1e-5, atol=1e-5)
    np.testing.assert_allclose(np.asarray(alogp), np.asarray(ral), rtol=1e-2, atol=1e-2)
    np.testing.assert_allclose(np.asarray(ent), np.asarray(rent), rtol=1e-2, atol=1e-2)
    # argmax check, tolerant of near-ties under bf16 weights:
    rl = np.asarray(rlogits)
    chosen = rl[np.arange(B), np.asarray(action)[:, 0]]
    assert np.all(chosen >= rl.max(axis=-1) - 1e-3)

    # ---- gridded ("parallel") path with a non-tile-multiple B (padded tail) ----
    B2 = 300
    x2 = jax.random.normal(kx2, (B2, OBS_DIM), jnp.float32)
    rnn2 = jnp.zeros((B2, 1), jnp.float32)
    masks2 = (jax.random.uniform(km2, (B2, 1)) > 0.25).astype(jnp.float32)
    prev2 = jax.random.normal(kpv2, (B2, 1), jnp.float32)

    out_t = jax.block_until_ready(
        policy_act(x2, rnn2, masks2, prev2, packed, batch_tile=128))
    out_g = jax.block_until_ready(
        policy_act(x2, rnn2, masks2, prev2, packed, batch_tile=None))
    for a, b in zip(out_t, out_g):
        np.testing.assert_allclose(np.asarray(a, dtype=np.float64),
                                   np.asarray(b, dtype=np.float64),
                                   rtol=1e-5, atol=1e-5)
    rv2, _, _, rvm2, _, _, rha2, _ = reference_act(x2, masks2, prev2, raw)
    np.testing.assert_allclose(np.asarray(out_t[0]), np.asarray(rv2), rtol=1e-2, atol=1e-2)
    np.testing.assert_allclose(np.asarray(out_t[7]), np.asarray(rha2), rtol=1e-2, atol=1e-2)

    print("KERNEL_OK")
</pallas_src>

<mosaic_0001>
module attributes {stable_mosaic.version = 11 : i64} {
  func.func @policy_act_kernel(%arg0: memref<8x32xf32, #tpu.memory_space<vmem>>, %arg1: memref<32x128xbf16, #tpu.memory_space<vmem>>, %arg2: memref<128x128xbf16, #tpu.memory_space<vmem>>, %arg3: memref<128x128xbf16, #tpu.memory_space<vmem>>, %arg4: memref<8x128xf32, #tpu.memory_space<vmem>>, %arg5: memref<8x128xf32, #tpu.memory_space<vmem>>) attributes {dimension_semantics = [], scalar_prefetch = 0 : i64, scratch_operands = 0 : i64, tpu.core_type = #tpu.core_type<tc>} {
    %c0 = arith.constant 0 : index
    %c0_0 = arith.constant 0 : index
    %0 = vector.load %arg0[%c0, %c0_0] : memref<8x32xf32, #tpu.memory_space<vmem>>, vector<8x32xf32>
    %1 = arith.truncf %0 : vector<8x32xf32> to vector<8x32xbf16>
    %c0_1 = arith.constant 0 : index
    %c0_2 = arith.constant 0 : index
    %2 = vector.load %arg4[%c0_1, %c0_2] : memref<8x128xf32, #tpu.memory_space<vmem>>, vector<1x128xf32>
    %c1 = arith.constant 1 : index
    %c0_3 = arith.constant 0 : index
    %3 = vector.load %arg4[%c1, %c0_3] : memref<8x128xf32, #tpu.memory_space<vmem>>, vector<1x128xf32>
    %c2 = arith.constant 2 : index
    %c0_4 = arith.constant 0 : index
    %4 = vector.load %arg4[%c2, %c0_4] : memref<8x128xf32, #tpu.memory_space<vmem>>, vector<1x128xf32>
    %c0_5 = arith.constant 0 : index
    %c0_6 = arith.constant 0 : index
    %5 = vector.load %arg1[%c0_5, %c0_6] : memref<32x128xbf16, #tpu.memory_space<vmem>>, vector<32x128xbf16>
    %cst = arith.constant dense<0.000000e+00> : vector<8x128xf32>
    %6 = tpu.matmul %1, %5, %cst {dimension_numbers = #tpu.dot_dimension_numbers<[1], [0], [0], [1], [0, 0, 1, 1], [], []>} : vector<8x32xbf16>, vector<32x128xbf16>, vector<8x128xf32> -> vector<8x128xf32>
    %7 = vector.broadcast %2 : vector<1x128xf32> to vector<8x128xf32>
    %8 = arith.addf %6, %7 : vector<8x128xf32>
    %9 = math.tanh %8 : vector<8x128xf32>
    %10 = arith.truncf %9 : vector<8x128xf32> to vector<8x128xbf16>
    %c0_7 = arith.constant 0 : index
    %c0_8 = arith.constant 0 : index
    %11 = vector.load %arg2[%c0_7, %c0_8] : memref<128x128xbf16, #tpu.memory_space<vmem>>, vector<128x128xbf16>
    %cst_9 = arith.constant dense<0.000000e+00> : vector<8x128xf32>
    %12 = tpu.matmul %10, %11, %cst_9 {dimension_numbers = #tpu.dot_dimension_numbers<[1], [0], [0], [1], [0, 0, 1, 1], [], []>} : vector<8x128xbf16>, vector<128x128xbf16>, vector<8x128xf32> -> vector<8x128xf32>
    %13 = vector.broadcast %3 : vector<1x128xf32> to vector<8x128xf32>
    %14 = arith.addf %12, %13 : vector<8x128xf32>
    %15 = math.tanh %14 : vector<8x128xf32>
    %16 = arith.truncf %15 : vector<8x128xf32> to vector<8x128xbf16>
    %c0_10 = arith.constant 0 : index
    %c0_11 = arith.constant 0 : index
    %17 = vector.load %arg3[%c0_10, %c0_11] : memref<128x128xbf16, #tpu.memory_space<vmem>>, vector<128x128xbf16>
    %cst_12 = arith.constant dense<0.000000e+00> : vector<8x128xf32>
    %18 = tpu.matmul %16, %17, %cst_12 {dimension_numbers = #tpu.dot_dimension_numbers<[1], [0], [0], [1], [0, 0, 1, 1], [], []>} : vector<8x128xbf16>, vector<128x128xbf16>, vector<8x128xf32> -> vector<8x128xf32>
    %19 = vector.broadcast %4 : vector<1x128xf32> to vector<8x128xf32>
    %20 = arith.addf %18, %19 : vector<8x128xf32>
    %21 = tpu.iota {dimensions = array<i32: 1>} : vector<8x128xi32>
    %c6_i32 = arith.constant 6 : i32
    %22 = vector.broadcast %c6_i32 : i32 to vector<8x128xi32>
    %23 = arith.cmpi slt, %21, %22 : vector<8x128xi32>
    %cst_13 = arith.constant -1.000000e+30 : f32
    %24 = vector.broadcast %cst_13 : f32 to vector<8x128xf32>
    %25 = arith.select %23, %20, %24 : vector<8x128xi1>, vector<8x128xf32>
    %cst_14 = arith.constant dense<0xFF800000> : vector<8xf32>
    %26 = vector.multi_reduction <maximumf>, %25, %cst_14 [1] : vector<8x128xf32> to vector<8xf32>
    %27 = vector.shape_cast %26 : vector<8xf32> to vector<8x1xf32>
    %28 = vector.broadcast %27 : vector<8x1xf32> to vector<8x128xf32>
    %29 = arith.subf %25, %28 : vector<8x128xf32>
    %30 = math.exp %29 : vector<8x128xf32>
    %cst_15 = arith.constant 0.000000e+00 : f32
    %31 = vector.broadcast %cst_15 : f32 to vector<8x128xf32>
    %32 = arith.select %23, %30, %31 : vector<8x128xi1>, vector<8x128xf32>
    %cst_16 = arith.constant dense<0.000000e+00> : vector<8xf32>
    %33 = vector.multi_reduction <add>, %32, %cst_16 [1] : vector<8x128xf32> to vector<8xf32>
    %34 = vector.shape_cast %33 : vector<8xf32> to vector<8x1xf32>
    %35 = math.log %34 : vector<8x1xf32>
    %36 = tpu.reciprocal %34 {approx = true} : vector<8x1xf32> -> vector<8x1xf32>
    %cst_17 = arith.constant 0.000000e+00 : f32
    %37 = vector.broadcast %cst_17 : f32 to vector<8x1xf32>
    %38 = arith.subf %37, %35 : vector<8x1xf32>
    %39 = arith.mulf %32, %29 : vector<8x128xf32>
    %cst_18 = arith.constant dense<0.000000e+00> : vector<8xf32>
    %40 = vector.multi_reduction <add>, %39, %cst_18 [1] : vector<8x128xf32> to vector<8xf32>
    %41 = vector.shape_cast %40 : vector<8xf32> to vector<8x1xf32>
    %42 = arith.mulf %41, %36 : vector<8x1xf32>
    %43 = arith.subf %35, %42 : vector<8x1xf32>
    %44 = vector.broadcast %27 : vector<8x1xf32> to vector<8x128xf32>
    %45 = arith.cmpf oeq, %25, %44 : vector<8x128xf32>
    %c128_i32 = arith.constant 128 : i32
    %46 = vector.broadcast %c128_i32 : i32 to vector<8x128xi32>
    %47 = arith.select %45, %21, %46 : vector<8x128xi1>, vector<8x128xi32>
    %cst_19 = arith.constant dense<2147483647> : vector<8xi32>
    %48 = vector.multi_reduction <minsi>, %47, %cst_19 [1] : vector<8x128xi32> to vector<8xi32>
    %49 = vector.shape_cast %48 : vector<8xi32> to vector<8x1xi32>
    %c64_i32 = arith.constant 64 : i32
    %50 = vector.broadcast %c64_i32 : i32 to vector<8x128xi32>
    %51 = arith.cmpi slt, %21, %50 : vector<8x128xi32>
    %52 = arith.select %51, %15, %20 : vector<8x128xi1>, vector<8x128xf32>
    %c65_i32 = arith.constant 65 : i32
    %53 = vector.broadcast %c65_i32 : i32 to vector<8x128xi32>
    %54 = arith.cmpi eq, %21, %53 : vector<8x128xi32>
    %55 = vector.shape_cast %38 : vector<8x1xf32> to vector<8x1xf32>
    %56 = vector.broadcast %55 : vector<8x1xf32> to vector<8x128xf32>
    %57 = arith.select %54, %56, %52 : vector<8x128xi1>, vector<8x128xf32>
    %c66_i32 = arith.constant 66 : i32
    %58 = vector.broadcast %c66_i32 : i32 to vector<8x128xi32>
    %59 = arith.cmpi eq, %21, %58 : vector<8x128xi32>
    %60 = vector.shape_cast %43 : vector<8x1xf32> to vector<8x1xf32>
    %61 = vector.broadcast %60 : vector<8x1xf32> to vector<8x128xf32>
    %62 = arith.select %59, %61, %57 : vector<8x128xi1>, vector<8x128xf32>
    %c67_i32 = arith.constant 67 : i32
    %63 = vector.broadcast %c67_i32 : i32 to vector<8x128xi32>
    %64 = arith.cmpi eq, %21, %63 : vector<8x128xi32>
    %65 = arith.sitofp %49 : vector<8x1xi32> to vector<8x1xf32>
    %66 = vector.shape_cast %65 : vector<8x1xf32> to vector<8x1xf32>
    %67 = vector.broadcast %66 : vector<8x1xf32> to vector<8x128xf32>
    %68 = arith.select %64, %67, %62 : vector<8x128xi1>, vector<8x128xf32>
    %c0_20 = arith.constant 0 : index
    %c0_21 = arith.constant 0 : index
    %69 = vector.load %arg5[%c0_20, %c0_21] : memref<8x128xf32, #tpu.memory_space<vmem>>, vector<8x128xf32>
    tpu.vector_store %arg5[%c0_20, %c0_21], %68 {strides = array<i32>} : memref<8x128xf32, #tpu.memory_space<vmem>>, vector<8x128xf32>,
    return
  }
}

</mosaic_0001>

<llo_original>
// kernel: tpu_custom_call.1
$region0: #{tpu_custom_call.1}
  #allocation0 [shape = 'u32[]', space=smem, size = 0x4, offset = 0x4, fixed_abs, tag = 'smem constant byte address 0x4 - core index']
  #allocation1 [shape = 'u32[144,128]{1,0:T(1,128)}', space=vmem, size = 0x12000, scoped, tag = 'internal scratch']
  %s0 = inlined_call_operand.hbm [shape: f32[8,32], index: 0, kind: input, shape index: {}]
  %s1 = inlined_call_operand.hbm [shape: bf16[32,128], index: 1, kind: input, shape index: {}]
  %s2 = inlined_call_operand.hbm [shape: bf16[128,128], index: 2, kind: input, shape index: {}]
  %s3 = inlined_call_operand.hbm [shape: bf16[128,128], index: 3, kind: input, shape index: {}]
  %s4 = inlined_call_operand.hbm [shape: f32[8,128], index: 4, kind: input, shape index: {}]
  %s5 = inlined_call_operand.hbm [shape: f32[8,128], index: 5, kind: output, shape index: {}]
  %s6 = sld [smem:[#allocation0]]
  $region50: #{tpu_custom_call.1} parent=0
    _
  %s8 = ssub.s32 1, %s6
  %s9 = scalar_select 0, %s8, %s6
  $region1: #{tpu_custom_call.1} parent=0
    #allocation2 [shape = 'u8[4096]{0}', space=vmem, size = 0x1000, scoped, tag = 'input window, operand 0, single buffered']
    #allocation3 [shape = 's32[1]{0}', space=sflag, size = 0x4, scoped, tag = 'scoped memory for tpu_custom_call.1']
    #allocation4 [shape = 's32[1]{0}', space=sflag, size = 0x4, scoped, tag = 'scoped memory for tpu_custom_call.1']
    #allocation5 [shape = 'u8[8192]{0}', space=vmem, size = 0x2000, scoped, tag = 'input window, operand 1, single buffered']
    #allocation6 [shape = 's32[1]{0}', space=sflag, size = 0x4, scoped, tag = 'scoped memory for tpu_custom_call.1']
    #allocation7 [shape = 'u8[32768]{0}', space=vmem, size = 0x8000, scoped, tag = 'input window, operand 2, single buffered']
    #allocation8 [shape = 'u8[32768]{0}', space=vmem, size = 0x8000, scoped, tag = 'input window, operand 3, single buffered']
    #allocation9 [shape = 's32[1]{0}', space=sflag, size = 0x4, scoped, tag = 'scoped memory for tpu_custom_call.1']
    #allocation10 [shape = 'u8[4096]{0}', space=vmem, size = 0x1000, scoped, tag = 'input window, operand 4, single buffered']
    #allocation11 [shape = 'u8[4096]{0}', space=vmem, size = 0x1000, scoped, tag = 'output window, operand 0, single buffered']
    %10 = vsyncpa [#allocation3], 0
    %11 = vsyncpa [#allocation6], 0
    %12 = vsyncpa [#allocation9], 0
    %13 = vsyncpa [#allocation4], 0
    // Predicated region
    $region2: #{tpu_custom_call.1} parent=1 // pred_check
      _
    $region3: #{tpu_custom_call.1} parent=1 // pred_check_branch
      %15 = sbr.rel (0) target = $region5
    $region4: #{tpu_custom_call.1} parent=1 // pred_region
      %s17 = ssub.s32 128, 128
      %18 = vsyncadd [#allocation3], %s17
      %s20 = sshll.u32 [#allocation2], 4
      %s21 = int_to_ptr.vmem [resolvable:$true] %s20
      %23 = dma.hbm_to_vmem [thread:$0]  %s0, 128, %s21, [#allocation3]
    $region5: #{tpu_custom_call.1} parent=1 // pred_fallthru
      _
    // Predicated region
    $region6: #{tpu_custom_call.1} parent=1 // pred_check
      _
    $region7: #{tpu_custom_call.1} parent=1 // pred_check_branch
      %25 = sbr.rel (0) target = $region9
    $region8: #{tpu_custom_call.1} parent=1 // pred_region
      %s27 = ssub.s32 256, 256
      %28 = vsyncadd [#allocation6], %s27
      %s29 = sshll.u32 [#allocation5], 4
      %s30 = int_to_ptr.vmem [resolvable:$true] %s29
      %35 = dma.hbm_to_vmem [thread:$0]  %s1, 256, %s30, [#allocation6], 64, 64, 4
    $region9: #{tpu_custom_call.1} parent=1 // pred_fallthru
      _
    // Predicated region
    $region10: #{tpu_custom_call.1} parent=1 // pred_check
      _
    $region11: #{tpu_custom_call.1} parent=1 // pred_check_branch
      %37 = sbr.rel (0) target = $region13
    $region12: #{tpu_custom_call.1} parent=1 // pred_region
      %s39 = ssub.s32 1024, 1024
      %40 = vsyncadd [#allocation6], %s39
      %s41 = sshll.u32 [#allocation7], 4
      %s42 = int_to_ptr.vmem [resolvable:$true] %s41
      %47 = dma.hbm_to_vmem [thread:$0]  %s2, 1024, %s42, [#allocation6], 64, 64, 4
    $region13: #{tpu_custom_call.1} parent=1 // pred_fallthru
      _
    // Predicated region
    $region14: #{tpu_custom_call.1} parent=1 // pred_check
      _
    $region15: #{tpu_custom_call.1} parent=1 // pred_check_branch
      %49 = sbr.rel (0) target = $region17
    $region16: #{tpu_custom_call.1} parent=1 // pred_region
      %s51 = ssub.s32 1024, 1024
      %52 = vsyncadd [#allocation9], %s51
      %s53 = sshll.u32 [#allocation8], 4
      %s54 = int_to_ptr.vmem [resolvable:$true] %s53
      %59 = dma.hbm_to_vmem [thread:$0]  %s3, 1024, %s54, [#allocation9], 64, 64, 4
    $region17: #{tpu_custom_call.1} parent=1 // pred_fallthru
      _
    // Predicated region
    $region18: #{tpu_custom_call.1} parent=1 // pred_check
      _
    $region19: #{tpu_custom_call.1} parent=1 // pred_check_branch
      %61 = sbr.rel (0) target = $region21
    $region20: #{tpu_custom_call.1} parent=1 // pred_region
      %s63 = ssub.s32 128, 128
      %64 = vsyncadd [#allocation9], %s63
      %s66 = sshll.u32 [#allocation10], 4
      %s67 = int_to_ptr.vmem [resolvable:$true] %s66
      %69 = dma.hbm_to_vmem [thread:$0]  %s4, 128, %s67, [#allocation9]
    $region21: #{tpu_custom_call.1} parent=1 // pred_fallthru
      _
    // Predicated region
    $region22: #{tpu_custom_call.1} parent=1 // pred_check
      _
    $region23: #{tpu_custom_call.1} parent=1 // pred_check_branch
      %71 = sbr.rel (0) target = $region25
    $region24: #{tpu_custom_call.1} parent=1 // pred_region
      %72 = dma.done [#allocation3], 128
    $region25: #{tpu_custom_call.1} parent=1 // pred_fallthru
      _
    // Predicated region
    $region26: #{tpu_custom_call.1} parent=1 // pred_check
      _
    $region27: #{tpu_custom_call.1} parent=1 // pred_check_branch
      %74 = sbr.rel (0) target = $region29
    $region28: #{tpu_custom_call.1} parent=1 // pred_region
      %75 = dma.done [#allocation6], 256
    $region29: #{tpu_custom_call.1} parent=1 // pred_fallthru
      _
    // Predicated region
    $region30: #{tpu_custom_call.1} parent=1 // pred_check
      _
    $region31: #{tpu_custom_call.1} parent=1 // pred_check_branch
      %77 = sbr.rel (0) target = $region33
    $region32: #{tpu_custom_call.1} parent=1 // pred_region
      %78 = dma.done [#allocation6], 1024
    $region33: #{tpu_custom_call.1} parent=1 // pred_fallthru
      _
    // Predicated region
    $region34: #{tpu_custom_call.1} parent=1 // pred_check
      _
    $region35: #{tpu_custom_call.1} parent=1 // pred_check_branch
      %80 = sbr.rel (0) target = $region37
    $region36: #{tpu_custom_call.1} parent=1 // pred_region
      %81 = dma.done [#allocation9], 1024
    $region37: #{tpu_custom_call.1} parent=1 // pred_fallthru
      _
    // Predicated region
    $region38: #{tpu_custom_call.1} parent=1 // pred_check
      _
    $region39: #{tpu_custom_call.1} parent=1 // pred_check_branch
      %83 = sbr.rel (0) target = $region41
    $region40: #{tpu_custom_call.1} parent=1 // pred_region
      %84 = dma.done [#allocation9], 128
    $region41: #{tpu_custom_call.1} parent=1 // pred_fallthru
      _
    %v86 = vld [vmem:[#allocation2] sm:$0xff]
    %v87 = vpack.c.bf16 %v86, %v86
    %v88 = vld [vmem:[#allocation10] sm:$0x1]
    %v89 = vld [vmem:[#allocation10 + $0x1] sm:$0x1]
    %v90 = vld [vmem:[#allocation10 + $0x2] sm:$0x1]
    %v91 = vld [vmem:[#allocation5] sm:$0xf]
    %v92 = vld [vmem:[#allocation5 + $0x4] sm:$0xf]
    %v93 = vld [vmem:[#allocation5 + $0x8] sm:$0xf]
    %v94 = vld [vmem:[#allocation5 + $0xc] sm:$0xf]
    %v95 = vlaneseq
    %v96 = vshrl.u32 %v95, 7
    %v97 = vsub.s32 0, %v96
    %v98 = vrot.slane %v88, %v97
    %v103 = vunpack.c.l.b16 %v91
    %v104 = vunpack.c.l.b16 %v92
    %v105 = vunpack.c.l.b16 %v93
    %v106 = vunpack.c.l.b16 %v94
    %v107 = vpack.c.b16 %v104, %v103
    %v108 = vpack.c.b16 %v106, %v105
    %vm111 = vcmask 261120
    %v113 = vsel %vm111, %v87, 0
    %115 = vmatprep.subr.bf16.mxu0 0
    %116 = vmatpush1.bf16.msra.mxu0 0
    %117 = vmatprep.subr.bf16.mxu0 0
    %118 = vmatpush1.bf16.msra.mxu0 0
    %119 = vmatprep.subr.bf16.mxu0 0
    %120 = vmatpush1.bf16.msra.mxu0 0
    %121 = vmatprep.subr.bf16.mxu0 0
    %122 = vmatpush1.bf16.msra.mxu0 0
    %123 = vmatprep.subr.bf16.mxu0 0
    %124 = vmatpush1.bf16.msra.mxu0 0
    %125 = vmatprep.subr.bf16.mxu0 0
    %126 = vmatpush1.bf16.msra.mxu0 0
    %127 = vmatprep.subr.bf16.mxu0 0
    %128 = vmatpush1.bf16.msra.mxu0 %v108
    %129 = vmatprep.subr.bf16.mxu0 0
    %130 = vmatpush1.bf16.msra.mxu0 %v107
    %131 = vmatprep.subr.bf16.mxu0 0
    %132 = vmatpush2.bf16.msra.mxu0 0
    %133 = vmatprep.subr.bf16.mxu0 0
    %134 = vmatpush2.bf16.msra.mxu0 0
    %135 = vmatprep.subr.bf16.mxu0 0
    %136 = vmatpush2.bf16.msra.mxu0 0
    %137 = vmatprep.subr.bf16.mxu0 0
    %138 = vmatpush2.bf16.msra.mxu0 0
    %139 = vmatprep.subr.bf16.mxu0 0
    %140 = vmatpush2.bf16.msra.mxu0 0
    %141 = vmatprep.subr.bf16.mxu0 0
    %142 = vmatpush2.bf16.msra.mxu0 0
    %143 = vmatprep.subr.bf16.mxu0 0
    %144 = vmatpush2.bf16.msra.mxu0 0
    %145 = vmatprep.subr.bf16.mxu0 0
    %146 = vmatpush2.bf16.msra.mxu0 0
    %147 = vmatprep.mubr.bf16.mxu0 0
    %148 = vmatmul.mubr.bf16.gmra.mxu0 %v113
    %v149 = vpop.f32.mrf.mxu0
    %v150 = vadd.f32 %v98, %v149
    %v151 = vpop.f32.mrf.mxu0
    %v152 = vpop.f32.mrf.mxu0
    %v153 = vpop.f32.mrf.mxu0
    %154 = vdwg.mxu0
    %v155 = vtanh.pop %v150
    %v156 = vpack.c.bf16 %v155, %v155
    %v157 = vld [vmem:[#allocation7] sm:$0xf]
    %v158 = vld [vmem:[#allocation7 + $0x4] sm:$0xf]
    %v159 = vld [vmem:[#allocation7 + $0x8] sm:$0xf]
    %v160 = vld [vmem:[#allocation7 + $0xc] sm:$0xf]
    %v161 = vld [vmem:[#allocation7 + $0x10] sm:$0xf]
    %v162 = vld [vmem:[#allocation7 + $0x14] sm:$0xf]
    %v163 = vld [vmem:[#allocation7 + $0x18] sm:$0xf]
    %v164 = vld [vmem:[#allocation7 + $0x1c] sm:$0xf]
    %v165 = vld [vmem:[#allocation7 + $0x20] sm:$0xf]
    %v166 = vld [vmem:[#allocation7 + $0x24] sm:$0xf]
    %v167 = vld [vmem:[#allocation7 + $0x28] sm:$0xf]
    %v168 = vld [vmem:[#allocation7 + $0x2c] sm:$0xf]
    %v169 = vld [vmem:[#allocation7 + $0x30] sm:$0xf]
    %v170 = vld [vmem:[#allocation7 + $0x34] sm:$0xf]
    %v171 = vld [vmem:[#allocation7 + $0x38] sm:$0xf]
    %v172 = vld [vmem:[#allocation7 + $0x3c] sm:$0xf]
    %v173 = vlaneseq
    %v174 = vshrl.u32 %v173, 7
    %v175 = vsub.s32 0, %v174
    %v176 = vrot.slane %v89, %v175
    %v193 = vunpack.c.l.b16 %v157
    %v194 = vunpack.c.l.b16 %v158
    %v195 = vunpack.c.l.b16 %v159
    %v196 = vunpack.c.l.b16 %v160
    %v197 = vunpack.c.l.b16 %v161
    %v198 = vunpack.c.l.b16 %v162
    %v199 = vunpack.c.l.b16 %v163
    %v200 = vunpack.c.l.b16 %v164
    %v201 = vunpack.c.l.b16 %v165
    %v202 = vunpack.c.l.b16 %v166
    %v203 = vunpack.c.l.b16 %v167
    %v204 = vunpack.c.l.b16 %v168
    %v205 = vunpack.c.l.b16 %v169
    %v206 = vunpack.c.l.b16 %v170
    %v207 = vunpack.c.l.b16 %v171
    %v208 = vunpack.c.l.b16 %v172
    %v209 = vpack.c.b16 %v194, %v193
    %v210 = vpack.c.b16 %v196, %v195
    %v211 = vpack.c.b16 %v198, %v197
    %v212 = vpack.c.b16 %v200, %v199
    %v213 = vpack.c.b16 %v202, %v201
    %v214 = vpack.c.b16 %v204, %v203
    %v215 = vpack.c.b16 %v206, %v205
    %v216 = vpack.c.b16 %v208, %v207
    %225 = vmatprep.subr.bf16.mxu0 0
    %226 = vmatpush1.bf16.msra.mxu0 %v216
    %227 = vmatprep.subr.bf16.mxu0 0
    %228 = vmatpush1.bf16.msra.mxu0 %v215
    %229 = vmatprep.subr.bf16.mxu0 0
    %230 = vmatpush1.bf16.msra.mxu0 %v214
    %231 = vmatprep.subr.bf16.mxu0 0
    %232 = vmatpush1.bf16.msra.mxu0 %v213
    %233 = vmatprep.subr.bf16.mxu0 0
    %234 = vmatpush1.bf16.msra.mxu0 %v212
    %235 = vmatprep.subr.bf16.mxu0 0
    %236 = vmatpush1.bf16.msra.mxu0 %v211
    %237 = vmatprep.subr.bf16.mxu0 0
    %238 = vmatpush1.bf16.msra.mxu0 %v210
    %239 = vmatprep.subr.bf16.mxu0 0
    %240 = vmatpush1.bf16.msra.mxu0 %v209
    %241 = vmatprep.subr.bf16.mxu0 0
    %242 = vmatpush2.bf16.msra.mxu0 0
    %243 = vmatprep.subr.bf16.mxu0 0
    %244 = vmatpush2.bf16.msra.mxu0 0
    %245 = vmatprep.subr.bf16.mxu0 0
    %246 = vmatpush2.bf16.msra.mxu0 0
    %247 = vmatprep.subr.bf16.mxu0 0
    %248 = vmatpush2.bf16.msra.mxu0 0
    %249 = vmatprep.subr.bf16.mxu0 0
    %250 = vmatpush2.bf16.msra.mxu0 0
    %251 = vmatprep.subr.bf16.mxu0 0
    %252 = vmatpush2.bf16.msra.mxu0 0
    %253 = vmatprep.subr.bf16.mxu0 0
    %254 = vmatpush2.bf16.msra.mxu0 0
    %255 = vmatprep.subr.bf16.mxu0 0
    %256 = vmatpush2.bf16.msra.mxu0 0
    %257 = vmatprep.mubr.bf16.mxu0 0
    %258 = vmatmul.mubr.bf16.gmra.mxu0 %v156
    %v259 = vpop.f32.mrf.mxu0
    %v260 = vadd.f32 %v176, %v259
    %v261 = vpop.f32.mrf.mxu0
    %v262 = vpop.f32.mrf.mxu0
    %v263 = vpop.f32.mrf.mxu0
    %264 = vdwg.mxu0
    %v265 = vtanh.pop %v260
    %v266 = vpack.c.bf16 %v265, %v265
    %v267 = vld [vmem:[#allocation8] sm:$0xf]
    %v268 = vld [vmem:[#allocation8 + $0x4] sm:$0xf]
    %v269 = vld [vmem:[#allocation8 + $0x8] sm:$0xf]
    %v270 = vld [vmem:[#allocation8 + $0xc] sm:$0xf]
    %v271 = vld [vmem:[#allocation8 + $0x10] sm:$0xf]
    %v272 = vld [vmem:[#allocation8 + $0x14] sm:$0xf]
    %v273 = vld [vmem:[#allocation8 + $0x18] sm:$0xf]
    %v274 = vld [vmem:[#allocation8 + $0x1c] sm:$0xf]
    %v275 = vld [vmem:[#allocation8 + $0x20] sm:$0xf]
    %v276 = vld [vmem:[#allocation8 + $0x24] sm:$0xf]
    %v277 = vld [vmem:[#allocation8 + $0x28] sm:$0xf]
    %v278 = vld [vmem:[#allocation8 + $0x2c] sm:$0xf]
    %v279 = vld [vmem:[#allocation8 + $0x30] sm:$0xf]
    %v280 = vld [vmem:[#allocation8 + $0x34] sm:$0xf]
    %v281 = vld [vmem:[#allocation8 + $0x38] sm:$0xf]
    %v282 = vld [vmem:[#allocation8 + $0x3c] sm:$0xf]
    %v283 = vlaneseq
    %v284 = vshrl.u32 %v283, 7
    %v285 = vsub.s32 0, %v284
    %v286 = vrot.slane %v90, %v285
    %v303 = vunpack.c.l.b16 %v267
    %v304 = vunpack.c.l.b16 %v268
    %v305 = vunpack.c.l.b16 %v269
    %v306 = vunpack.c.l.b16 %v270
    %v307 = vunpack.c.l.b16 %v271
    %v308 = vunpack.c.l.b16 %v272
    %v309 = vunpack.c.l.b16 %v273
    %v310 = vunpack.c.l.b16 %v274
    %v311 = vunpack.c.l.b16 %v275
    %v312 = vunpack.c.l.b16 %v276
    %v313 = vunpack.c.l.b16 %v277
    %v314 = vunpack.c.l.b16 %v278
    %v315 = vunpack.c.l.b16 %v279
    %v316 = vunpack.c.l.b16 %v280
    %v317 = vunpack.c.l.b16 %v281
    %v318 = vunpack.c.l.b16 %v282
    %v319 = vpack.c.b16 %v304, %v303
    %v320 = vpack.c.b16 %v306, %v305
    %v321 = vpack.c.b16 %v308, %v307
    %v322 = vpack.c.b16 %v310, %v309
    %v323 = vpack.c.b16 %v312, %v311
    %v324 = vpack.c.b16 %v314, %v313
    %v325 = vpack.c.b16 %v316, %v315
    %v326 = vpack.c.b16 %v318, %v317
    %335 = vmatprep.subr.bf16.mxu0 0
    %336 = vmatpush1.bf16.msra.mxu0 %v326
    %337 = vmatprep.subr.bf16.mxu0 0
    %338 = vmatpush1.bf16.msra.mxu0 %v325
    %339 = vmatprep.subr.bf16.mxu0 0
    %340 = vmatpush1.bf16.msra.mxu0 %v324
    %341 = vmatprep.subr.bf16.mxu0 0
    %342 = vmatpush1.bf16.msra.mxu0 %v323
    %343 = vmatprep.subr.bf16.mxu0 0
    %344 = vmatpush1.bf16.msra.mxu0 %v322
    %345 = vmatprep.subr.bf16.mxu0 0
    %346 = vmatpush1.bf16.msra.mxu0 %v321
    %347 = vmatprep.subr.bf16.mxu0 0
    %348 = vmatpush1.bf16.msra.mxu0 %v320
    %349 = vmatprep.subr.bf16.mxu0 0
    %350 = vmatpush1.bf16.msra.mxu0 %v319
    %351 = vmatprep.subr.bf16.mxu0 0
    %352 = vmatpush2.bf16.msra.mxu0 0
    %353 = vmatprep.subr.bf16.mxu0 0
    %354 = vmatpush2.bf16.msra.mxu0 0
    %355 = vmatprep.subr.bf16.mxu0 0
    %356 = vmatpush2.bf16.msra.mxu0 0
    %357 = vmatprep.subr.bf16.mxu0 0
    %358 = vmatpush2.bf16.msra.mxu0 0
    %359 = vmatprep.subr.bf16.mxu0 0
    %360 = vmatpush2.bf16.msra.mxu0 0
    %361 = vmatprep.subr.bf16.mxu0 0
    %362 = vmatpush2.bf16.msra.mxu0 0
    %363 = vmatprep.subr.bf16.mxu0 0
    %364 = vmatpush2.bf16.msra.mxu0 0
    %365 = vmatprep.subr.bf16.mxu0 0
    %366 = vmatpush2.bf16.msra.mxu0 0
    %367 = vmatprep.mubr.bf16.mxu0 0
    %368 = vmatmul.mubr.bf16.gmra.mxu0 %v266
    %v369 = vpop.f32.mrf.mxu0
    %v370 = vadd.f32 %v286, %v369
    %v371 = vpop.f32.mrf.mxu0
    %v372 = vpop.f32.mrf.mxu0
    %v373 = vpop.f32.mrf.mxu0
    %374 = vdwg.mxu0
    %v375 = vlaneseq
    %v376 = vand.u32 %v375, 127
    %vm377 = vcmp.lt.s32.totalorder %v376, 6
    %v378 = vsel %vm377, %v370, -1e+30
    %379 = vmax.xlane.f32.xlu0 %v378
    %v380 = vpop.xlane.xlu0 %379
    %v381 = vsub.f32 %v378, %v380
    %v382 = vmul.f32 %v381, 1.442695
    %v383 = vpow.pop %v382
    %v384 = vsel %vm377, %v383, 0.0
    %385 = vadd.xlane.f32.xlu0 %v384
    %v386 = vpop.xlane.xlu0 %385
    %v387 = vlog2.pop %v386
    %v388 = vmul.f32 %v387, 0.6931472
    %v389 = vrcp.pop %v386
    %v390 = vsub.f32 0.0, %v388
    %v391 = vmul.f32 %v384, %v381
    %392 = vadd.xlane.f32.xlu0 %v391
    %v393 = vpop.xlane.xlu0 %392
    %v394 = vmul.f32 %v393, %v389
    %v395 = vsub.f32 %v388, %v394
    %vm396 = vcmp.eq.f32.partialorder %v378, %v380
    %v397 = vsel %vm396, %v376, 128
    %v398 = vand.u32 %v397, 65535
    %v399 = vshra.s32 %v397, 16
    %v400 = vcvt.s32.f32 %v398
    %v401 = vcvt.s32.f32 %v399
    %402 = vmin.xlane.f32.xlu0 %v401
    %v403 = vpop.xlane.xlu0 %402
    %vm404 = vcmp.eq.f32.partialorder %v401, %v403
    %v405 = vsel %vm404, %v400, inf
    %406 = vmin.xlane.f32.xlu0 %v405
    %v407 = vpop.xlane.xlu0 %406
    %v408 = vcvt.f32.s32 %v407
    %v409 = vcvt.f32.s32 %v403
    %v410 = vshll.u32 %v409, 16
    %v411 = vadd.s32 %v410, %v408
    %vm412 = vcmp.lt.s32.totalorder %v376, 64
    %v413 = vsel %vm412, %v265, %v370
    %vm414 = vcmp.eq.s32.totalorder %v376, 65
    %v415 = vsel %vm414, %v390, %v413
    %vm416 = vcmp.eq.s32.totalorder %v376, 66
    %v417 = vsel %vm416, %v395, %v415
    %vm418 = vcmp.eq.s32.totalorder %v376, 67
    %v419 = vcvt.s32.f32 %v411
    %v420 = vsel %vm418, %v419, %v417
    %421 = vst [vmem:[#allocation11] sm:$0xff] %v420
    // Predicated region
    $region42: #{tpu_custom_call.1} parent=1 // pred_check
      _
    $region43: #{tpu_custom_call.1} parent=1 // pred_check_branch
      %423 = sbr.rel (0) target = $region45
    $region44: #{tpu_custom_call.1} parent=1 // pred_region
      %s425 = ssub.s32 128, 128
      %426 = vsyncadd [#allocation4], %s425
      %s428 = sshll.u32 [#allocation11], 4
      %s429 = int_to_ptr.vmem [resolvable:$true] %s428
      %431 = dma.vmem_to_hbm [thread:$0]  %s429, 128, %s5, [#allocation4]
    $region45: #{tpu_custom_call.1} parent=1 // pred_fallthru
      _
    // Predicated region
    $region46: #{tpu_custom_call.1} parent=1 // pred_check
      _
    $region47: #{tpu_custom_call.1} parent=1 // pred_check_branch
      %433 = sbr.rel (0) target = $region49
    $region48: #{tpu_custom_call.1} parent=1 // pred_region
      %434 = dma.done [#allocation4], 128
    $region49: #{tpu_custom_call.1} parent=1 // pred_fallthru
      _
    %435 = vsyncpa [#allocation3], 1
    %436 = vsyncpa [#allocation6], 1
    %437 = vsyncpa [#allocation9], 1
    %438 = vsyncpa [#allocation4], 1

</llo_original>
